<compile_context>
chip_gen: v7x
topology: tpu7x:2x2x1
jax: 0.10.0
libtpu: 0.0.40
codegen_flags: <defaults>
</compile_context>

<pallas_src>
import functools

import jax
import jax.numpy as jnp
from jax.experimental import pallas as pl
from jax.experimental.pallas import tpu as pltpu

# Fixed, non-trainable 1x1-conv grayscale weights from the module's __init__.
_GRAY_W = (0.2989, 0.587, 0.114)

_LANE = 128
_DEFAULT_TILE_PIXELS = 32768  # 256 rows of 128 lanes; ~10 MiB double-buffered


def _preprocess_kernel(x_ref, o_ref, *, r_sub):
    # x_ref: VMEM f32[3*F, r_tile, 128]  -- one batch element's row tile,
    #                                       planes laid out [f0.R, f0.G, f0.B, f1.R, ...]
    # o_ref: VMEM f32[F,   r_tile, 128]
    num_frames = o_ref.shape[0]
    r_tile = o_ref.shape[1]
    n_sub = r_tile // r_sub
    w_r, w_g, w_b = _GRAY_W
    inv_f = 1.0 / num_frames
    inv_255 = 1.0 / 255.0

    def chunk(rows):
        # Grayscale per frame (1x1 conv == weighted channel sum on the VPU),
        # with the background sum fused into the same pass. Gray planes stay
        # in vregs: r_sub*128 f32 per plane, ~num_frames+handful vregs live.
        grays = []
        bg = None
        for f in range(num_frames):
            g = (w_r * x_ref[3 * f, rows, :]
                 + w_g * x_ref[3 * f + 1, rows, :]
                 + w_b * x_ref[3 * f + 2, rows, :])
            grays.append(g)
            bg = g if bg is None else bg + g
        bg = bg * inv_f
        # fg = relu(gray - bg) / 255, written exactly once.
        for f in range(num_frames):
            o_ref[f, rows, :] = jnp.maximum(grays[f] - bg, 0.0) * inv_255

    if n_sub == 1:
        chunk(pl.ds(0, r_tile))
    else:
        # Decouple DMA tile size from vreg live-ranges: small row sub-chunks.
        @pl.loop(0, n_sub)
        def _(s):
            chunk(pl.ds(pl.multiple_of(s * r_sub, r_sub), r_sub))


def preprocess_layer(x, num_frames=10, tile_pixels=_DEFAULT_TILE_PIXELS):
    """x: (B, num_frames*3, H, W) -> (B, num_frames, H, W), float32."""
    B, C, H, W = x.shape
    F = num_frames
    assert C == 3 * F
    if x.dtype != jnp.float32:
        # TODO(synk): read u8/bf16 natively and cast in-kernel to cut HBM read
        # bytes; needs dtype-specific sublane tiling on the row axis.
        x = x.astype(jnp.float32)

    # Dense-lane layout: (B, C, rows, 128). Only pad the pixel axis up to a
    # multiple of 128 lanes (a no-op for typical H*W); no tile-size padding.
    P = H * W
    P128 = ((P + _LANE - 1) // _LANE) * _LANE
    x3 = x.reshape(B, C, P)
    if P128 != P:
        x3 = jnp.pad(x3, ((0, 0), (0, 0), (0, P128 - P)))
    R_total = P128 // _LANE
    x4 = x3.reshape(B, C, R_total, _LANE)

    # Row-tile selection. r_tile is a multiple of r_sub; ragged last tile on
    # the row axis is handled by Pallas boundary masking (no host pad/copy).
    target_rows = max(8, tile_pixels // _LANE)
    if R_total <= 16:
        r_tile = R_total      # equals full dim -> always a legal block shape
        r_sub = R_total
    else:
        r_tile = min((target_rows // 8) * 8, (R_total // 8) * 8)
        r_sub = 8
    num_r_tiles = pl.cdiv(R_total, r_tile)

    # Pure HBM traffic: read 12 B + write 4 B per output pixel; trivial flops.
    cost = pl.CostEstimate(
        flops=9 * B * F * P,
        transcendentals=0,
        bytes_accessed=4 * (B * C * P + B * F * P),
    )

    kernel = functools.partial(_preprocess_kernel, r_sub=r_sub)

    out4 = pl.pallas_call(
        kernel,
        out_shape=jax.ShapeDtypeStruct((B, F, R_total, _LANE), jnp.float32),
        grid=(B, num_r_tiles),
        in_specs=[
            pl.BlockSpec((pl.Squeezed(), C, r_tile, _LANE),
                         lambda b, t: (b, 0, t, 0)),
        ],
        out_specs=pl.BlockSpec((pl.Squeezed(), F, r_tile, _LANE),
                               lambda b, t: (b, 0, t, 0)),
        compiler_params=pltpu.CompilerParams(
            dimension_semantics=("parallel", "parallel")),
        cost_estimate=cost,
    )(x4)

    out = out4.reshape(B, F, P128)
    if P128 != P:
        out = out[:, :, :P]
    return out.reshape(B, F, H, W)


def _reference(x, num_frames=10):
    B, C, H, W = x.shape
    F = num_frames
    w = jnp.array(_GRAY_W, dtype=jnp.float32)
    x5 = x.reshape(B, F, 3, H, W).astype(jnp.float32)
    gray = jnp.einsum("bfchw,c->bfhw", x5, w)
    bg = gray.mean(axis=1, keepdims=True)
    return jnp.maximum(gray - bg, 0.0) / 255.0


if __name__ == "__main__":
    B, num_frames, H, W = 2, 10, 16, 16
    key = jax.random.PRNGKey(0)
    # pixel-like values in [0, 255)
    x = jax.random.uniform(key, (B, num_frames * 3, H, W),
                           dtype=jnp.float32, minval=0.0, maxval=255.0)

    out = preprocess_layer(x, num_frames=num_frames)
    out = jax.block_until_ready(out)

    ref = _reference(x, num_frames=num_frames)
    assert out.shape == (B, num_frames, H, W)
    assert jnp.allclose(out, ref, atol=1e-5, rtol=1e-5)
    print("KERNEL_OK")
</pallas_src>

<mosaic_0001>
module attributes {stable_mosaic.version = 11 : i64} {
  func.func @_preprocess_kernel(%arg0: i32, %arg1: i32, %arg2: memref<1x30x2x128xf32, #tpu.memory_space<vmem>>, %arg3: memref<1x10x2x128xf32, #tpu.memory_space<vmem>>) attributes {dimension_semantics = [#tpu.dimension_semantics<parallel>, #tpu.dimension_semantics<parallel>], iteration_bounds = array<i64: 2, 1>, scalar_prefetch = 0 : i64, scratch_operands = 0 : i64, tpu.core_type = #tpu.core_type<tc>, window_params = [{transform_indices = @transform_0, window_bounds = array<i64: 1, 30, 2, 128>}, {transform_indices = @transform_1, window_bounds = array<i64: 1, 10, 2, 128>}]} {
    %c0 = arith.constant 0 : index
    %c0_0 = arith.constant 0 : index
    %c0_1 = arith.constant 0 : index
    %c0_2 = arith.constant 0 : index
    %0 = vector.load %arg2[%c0, %c0_0, %c0_1, %c0_2] : memref<1x30x2x128xf32, #tpu.memory_space<vmem>>, vector<1x1x2x128xf32>
    %1 = vector.shape_cast %0 : vector<1x1x2x128xf32> to vector<2x128xf32>
    %cst = arith.constant 2.989000e-01 : f32
    %2 = vector.broadcast %cst : f32 to vector<2x128xf32>
    %3 = arith.mulf %2, %1 : vector<2x128xf32>
    %c0_3 = arith.constant 0 : index
    %c1 = arith.constant 1 : index
    %c0_4 = arith.constant 0 : index
    %c0_5 = arith.constant 0 : index
    %4 = vector.load %arg2[%c0_3, %c1, %c0_4, %c0_5] : memref<1x30x2x128xf32, #tpu.memory_space<vmem>>, vector<1x1x2x128xf32>
    %5 = vector.shape_cast %4 : vector<1x1x2x128xf32> to vector<2x128xf32>
    %cst_6 = arith.constant 5.870000e-01 : f32
    %6 = vector.broadcast %cst_6 : f32 to vector<2x128xf32>
    %7 = arith.mulf %6, %5 : vector<2x128xf32>
    %8 = arith.addf %3, %7 : vector<2x128xf32>
    %c0_7 = arith.constant 0 : index
    %c2 = arith.constant 2 : index
    %c0_8 = arith.constant 0 : index
    %c0_9 = arith.constant 0 : index
    %9 = vector.load %arg2[%c0_7, %c2, %c0_8, %c0_9] : memref<1x30x2x128xf32, #tpu.memory_space<vmem>>, vector<1x1x2x128xf32>
    %10 = vector.shape_cast %9 : vector<1x1x2x128xf32> to vector<2x128xf32>
    %cst_10 = arith.constant 1.140000e-01 : f32
    %11 = vector.broadcast %cst_10 : f32 to vector<2x128xf32>
    %12 = arith.mulf %11, %10 : vector<2x128xf32>
    %13 = arith.addf %8, %12 : vector<2x128xf32>
    %c0_11 = arith.constant 0 : index
    %c3 = arith.constant 3 : index
    %c0_12 = arith.constant 0 : index
    %c0_13 = arith.constant 0 : index
    %14 = vector.load %arg2[%c0_11, %c3, %c0_12, %c0_13] : memref<1x30x2x128xf32, #tpu.memory_space<vmem>>, vector<1x1x2x128xf32>
    %15 = vector.shape_cast %14 : vector<1x1x2x128xf32> to vector<2x128xf32>
    %cst_14 = arith.constant 2.989000e-01 : f32
    %16 = vector.broadcast %cst_14 : f32 to vector<2x128xf32>
    %17 = arith.mulf %16, %15 : vector<2x128xf32>
    %c0_15 = arith.constant 0 : index
    %c4 = arith.constant 4 : index
    %c0_16 = arith.constant 0 : index
    %c0_17 = arith.constant 0 : index
    %18 = vector.load %arg2[%c0_15, %c4, %c0_16, %c0_17] : memref<1x30x2x128xf32, #tpu.memory_space<vmem>>, vector<1x1x2x128xf32>
    %19 = vector.shape_cast %18 : vector<1x1x2x128xf32> to vector<2x128xf32>
    %cst_18 = arith.constant 5.870000e-01 : f32
    %20 = vector.broadcast %cst_18 : f32 to vector<2x128xf32>
    %21 = arith.mulf %20, %19 : vector<2x128xf32>
    %22 = arith.addf %17, %21 : vector<2x128xf32>
    %c0_19 = arith.constant 0 : index
    %c5 = arith.constant 5 : index
    %c0_20 = arith.constant 0 : index
    %c0_21 = arith.constant 0 : index
    %23 = vector.load %arg2[%c0_19, %c5, %c0_20, %c0_21] : memref<1x30x2x128xf32, #tpu.memory_space<vmem>>, vector<1x1x2x128xf32>
    %24 = vector.shape_cast %23 : vector<1x1x2x128xf32> to vector<2x128xf32>
    %cst_22 = arith.constant 1.140000e-01 : f32
    %25 = vector.broadcast %cst_22 : f32 to vector<2x128xf32>
    %26 = arith.mulf %25, %24 : vector<2x128xf32>
    %27 = arith.addf %22, %26 : vector<2x128xf32>
    %28 = arith.addf %13, %27 : vector<2x128xf32>
    %c0_23 = arith.constant 0 : index
    %c6 = arith.constant 6 : index
    %c0_24 = arith.constant 0 : index
    %c0_25 = arith.constant 0 : index
    %29 = vector.load %arg2[%c0_23, %c6, %c0_24, %c0_25] : memref<1x30x2x128xf32, #tpu.memory_space<vmem>>, vector<1x1x2x128xf32>
    %30 = vector.shape_cast %29 : vector<1x1x2x128xf32> to vector<2x128xf32>
    %cst_26 = arith.constant 2.989000e-01 : f32
    %31 = vector.broadcast %cst_26 : f32 to vector<2x128xf32>
    %32 = arith.mulf %31, %30 : vector<2x128xf32>
    %c0_27 = arith.constant 0 : index
    %c7 = arith.constant 7 : index
    %c0_28 = arith.constant 0 : index
    %c0_29 = arith.constant 0 : index
    %33 = vector.load %arg2[%c0_27, %c7, %c0_28, %c0_29] : memref<1x30x2x128xf32, #tpu.memory_space<vmem>>, vector<1x1x2x128xf32>
    %34 = vector.shape_cast %33 : vector<1x1x2x128xf32> to vector<2x128xf32>
    %cst_30 = arith.constant 5.870000e-01 : f32
    %35 = vector.broadcast %cst_30 : f32 to vector<2x128xf32>
    %36 = arith.mulf %35, %34 : vector<2x128xf32>
    %37 = arith.addf %32, %36 : vector<2x128xf32>
    %c0_31 = arith.constant 0 : index
    %c8 = arith.constant 8 : index
    %c0_32 = arith.constant 0 : index
    %c0_33 = arith.constant 0 : index
    %38 = vector.load %arg2[%c0_31, %c8, %c0_32, %c0_33] : memref<1x30x2x128xf32, #tpu.memory_space<vmem>>, vector<1x1x2x128xf32>
    %39 = vector.shape_cast %38 : vector<1x1x2x128xf32> to vector<2x128xf32>
    %cst_34 = arith.constant 1.140000e-01 : f32
    %40 = vector.broadcast %cst_34 : f32 to vector<2x128xf32>
    %41 = arith.mulf %40, %39 : vector<2x128xf32>
    %42 = arith.addf %37, %41 : vector<2x128xf32>
    %43 = arith.addf %28, %42 : vector<2x128xf32>
    %c0_35 = arith.constant 0 : index
    %c9 = arith.constant 9 : index
    %c0_36 = arith.constant 0 : index
    %c0_37 = arith.constant 0 : index
    %44 = vector.load %arg2[%c0_35, %c9, %c0_36, %c0_37] : memref<1x30x2x128xf32, #tpu.memory_space<vmem>>, vector<1x1x2x128xf32>
    %45 = vector.shape_cast %44 : vector<1x1x2x128xf32> to vector<2x128xf32>
    %cst_38 = arith.constant 2.989000e-01 : f32
    %46 = vector.broadcast %cst_38 : f32 to vector<2x128xf32>
    %47 = arith.mulf %46, %45 : vector<2x128xf32>
    %c0_39 = arith.constant 0 : index
    %c10 = arith.constant 10 : index
    %c0_40 = arith.constant 0 : index
    %c0_41 = arith.constant 0 : index
    %48 = vector.load %arg2[%c0_39, %c10, %c0_40, %c0_41] : memref<1x30x2x128xf32, #tpu.memory_space<vmem>>, vector<1x1x2x128xf32>
    %49 = vector.shape_cast %48 : vector<1x1x2x128xf32> to vector<2x128xf32>
    %cst_42 = arith.constant 5.870000e-01 : f32
    %50 = vector.broadcast %cst_42 : f32 to vector<2x128xf32>
    %51 = arith.mulf %50, %49 : vector<2x128xf32>
    %52 = arith.addf %47, %51 : vector<2x128xf32>
    %c0_43 = arith.constant 0 : index
    %c11 = arith.constant 11 : index
    %c0_44 = arith.constant 0 : index
    %c0_45 = arith.constant 0 : index
    %53 = vector.load %arg2[%c0_43, %c11, %c0_44, %c0_45] : memref<1x30x2x128xf32, #tpu.memory_space<vmem>>, vector<1x1x2x128xf32>
    %54 = vector.shape_cast %53 : vector<1x1x2x128xf32> to vector<2x128xf32>
    %cst_46 = arith.constant 1.140000e-01 : f32
    %55 = vector.broadcast %cst_46 : f32 to vector<2x128xf32>
    %56 = arith.mulf %55, %54 : vector<2x128xf32>
    %57 = arith.addf %52, %56 : vector<2x128xf32>
    %58 = arith.addf %43, %57 : vector<2x128xf32>
    %c0_47 = arith.constant 0 : index
    %c12 = arith.constant 12 : index
    %c0_48 = arith.constant 0 : index
    %c0_49 = arith.constant 0 : index
    %59 = vector.load %arg2[%c0_47, %c12, %c0_48, %c0_49] : memref<1x30x2x128xf32, #tpu.memory_space<vmem>>, vector<1x1x2x128xf32>
    %60 = vector.shape_cast %59 : vector<1x1x2x128xf32> to vector<2x128xf32>
    %cst_50 = arith.constant 2.989000e-01 : f32
    %61 = vector.broadcast %cst_50 : f32 to vector<2x128xf32>
    %62 = arith.mulf %61, %60 : vector<2x128xf32>
    %c0_51 = arith.constant 0 : index
    %c13 = arith.constant 13 : index
    %c0_52 = arith.constant 0 : index
    %c0_53 = arith.constant 0 : index
    %63 = vector.load %arg2[%c0_51, %c13, %c0_52, %c0_53] : memref<1x30x2x128xf32, #tpu.memory_space<vmem>>, vector<1x1x2x128xf32>
    %64 = vector.shape_cast %63 : vector<1x1x2x128xf32> to vector<2x128xf32>
    %cst_54 = arith.constant 5.870000e-01 : f32
    %65 = vector.broadcast %cst_54 : f32 to vector<2x128xf32>
    %66 = arith.mulf %65, %64 : vector<2x128xf32>
    %67 = arith.addf %62, %66 : vector<2x128xf32>
    %c0_55 = arith.constant 0 : index
    %c14 = arith.constant 14 : index
    %c0_56 = arith.constant 0 : index
    %c0_57 = arith.constant 0 : index
    %68 = vector.load %arg2[%c0_55, %c14, %c0_56, %c0_57] : memref<1x30x2x128xf32, #tpu.memory_space<vmem>>, vector<1x1x2x128xf32>
    %69 = vector.shape_cast %68 : vector<1x1x2x128xf32> to vector<2x128xf32>
    %cst_58 = arith.constant 1.140000e-01 : f32
    %70 = vector.broadcast %cst_58 : f32 to vector<2x128xf32>
    %71 = arith.mulf %70, %69 : vector<2x128xf32>
    %72 = arith.addf %67, %71 : vector<2x128xf32>
    %73 = arith.addf %58, %72 : vector<2x128xf32>
    %c0_59 = arith.constant 0 : index
    %c15 = arith.constant 15 : index
    %c0_60 = arith.constant 0 : index
    %c0_61 = arith.constant 0 : index
    %74 = vector.load %arg2[%c0_59, %c15, %c0_60, %c0_61] : memref<1x30x2x128xf32, #tpu.memory_space<vmem>>, vector<1x1x2x128xf32>
    %75 = vector.shape_cast %74 : vector<1x1x2x128xf32> to vector<2x128xf32>
    %cst_62 = arith.constant 2.989000e-01 : f32
    %76 = vector.broadcast %cst_62 : f32 to vector<2x128xf32>
    %77 = arith.mulf %76, %75 : vector<2x128xf32>
    %c0_63 = arith.constant 0 : index
    %c16 = arith.constant 16 : index
    %c0_64 = arith.constant 0 : index
    %c0_65 = arith.constant 0 : index
    %78 = vector.load %arg2[%c0_63, %c16, %c0_64, %c0_65] : memref<1x30x2x128xf32, #tpu.memory_space<vmem>>, vector<1x1x2x128xf32>
    %79 = vector.shape_cast %78 : vector<1x1x2x128xf32> to vector<2x128xf32>
    %cst_66 = arith.constant 5.870000e-01 : f32
    %80 = vector.broadcast %cst_66 : f32 to vector<2x128xf32>
    %81 = arith.mulf %80, %79 : vector<2x128xf32>
    %82 = arith.addf %77, %81 : vector<2x128xf32>
    %c0_67 = arith.constant 0 : index
    %c17 = arith.constant 17 : index
    %c0_68 = arith.constant 0 : index
    %c0_69 = arith.constant 0 : index
    %83 = vector.load %arg2[%c0_67, %c17, %c0_68, %c0_69] : memref<1x30x2x128xf32, #tpu.memory_space<vmem>>, vector<1x1x2x128xf32>
    %84 = vector.shape_cast %83 : vector<1x1x2x128xf32> to vector<2x128xf32>
    %cst_70 = arith.constant 1.140000e-01 : f32
    %85 = vector.broadcast %cst_70 : f32 to vector<2x128xf32>
    %86 = arith.mulf %85, %84 : vector<2x128xf32>
    %87 = arith.addf %82, %86 : vector<2x128xf32>
    %88 = arith.addf %73, %87 : vector<2x128xf32>
    %c0_71 = arith.constant 0 : index
    %c18 = arith.constant 18 : index
    %c0_72 = arith.constant 0 : index
    %c0_73 = arith.constant 0 : index
    %89 = vector.load %arg2[%c0_71, %c18, %c0_72, %c0_73] : memref<1x30x2x128xf32, #tpu.memory_space<vmem>>, vector<1x1x2x128xf32>
    %90 = vector.shape_cast %89 : vector<1x1x2x128xf32> to vector<2x128xf32>
    %cst_74 = arith.constant 2.989000e-01 : f32
    %91 = vector.broadcast %cst_74 : f32 to vector<2x128xf32>
    %92 = arith.mulf %91, %90 : vector<2x128xf32>
    %c0_75 = arith.constant 0 : index
    %c19 = arith.constant 19 : index
    %c0_76 = arith.constant 0 : index
    %c0_77 = arith.constant 0 : index
    %93 = vector.load %arg2[%c0_75, %c19, %c0_76, %c0_77] : memref<1x30x2x128xf32, #tpu.memory_space<vmem>>, vector<1x1x2x128xf32>
    %94 = vector.shape_cast %93 : vector<1x1x2x128xf32> to vector<2x128xf32>
    %cst_78 = arith.constant 5.870000e-01 : f32
    %95 = vector.broadcast %cst_78 : f32 to vector<2x128xf32>
    %96 = arith.mulf %95, %94 : vector<2x128xf32>
    %97 = arith.addf %92, %96 : vector<2x128xf32>
    %c0_79 = arith.constant 0 : index
    %c20 = arith.constant 20 : index
    %c0_80 = arith.constant 0 : index
    %c0_81 = arith.constant 0 : index
    %98 = vector.load %arg2[%c0_79, %c20, %c0_80, %c0_81] : memref<1x30x2x128xf32, #tpu.memory_space<vmem>>, vector<1x1x2x128xf32>
    %99 = vector.shape_cast %98 : vector<1x1x2x128xf32> to vector<2x128xf32>
    %cst_82 = arith.constant 1.140000e-01 : f32
    %100 = vector.broadcast %cst_82 : f32 to vector<2x128xf32>
    %101 = arith.mulf %100, %99 : vector<2x128xf32>
    %102 = arith.addf %97, %101 : vector<2x128xf32>
    %103 = arith.addf %88, %102 : vector<2x128xf32>
    %c0_83 = arith.constant 0 : index
    %c21 = arith.constant 21 : index
    %c0_84 = arith.constant 0 : index
    %c0_85 = arith.constant 0 : index
    %104 = vector.load %arg2[%c0_83, %c21, %c0_84, %c0_85] : memref<1x30x2x128xf32, #tpu.memory_space<vmem>>, vector<1x1x2x128xf32>
    %105 = vector.shape_cast %104 : vector<1x1x2x128xf32> to vector<2x128xf32>
    %cst_86 = arith.constant 2.989000e-01 : f32
    %106 = vector.broadcast %cst_86 : f32 to vector<2x128xf32>
    %107 = arith.mulf %106, %105 : vector<2x128xf32>
    %c0_87 = arith.constant 0 : index
    %c22 = arith.constant 22 : index
    %c0_88 = arith.constant 0 : index
    %c0_89 = arith.constant 0 : index
    %108 = vector.load %arg2[%c0_87, %c22, %c0_88, %c0_89] : memref<1x30x2x128xf32, #tpu.memory_space<vmem>>, vector<1x1x2x128xf32>
    %109 = vector.shape_cast %108 : vector<1x1x2x128xf32> to vector<2x128xf32>
    %cst_90 = arith.constant 5.870000e-01 : f32
    %110 = vector.broadcast %cst_90 : f32 to vector<2x128xf32>
    %111 = arith.mulf %110, %109 : vector<2x128xf32>
    %112 = arith.addf %107, %111 : vector<2x128xf32>
    %c0_91 = arith.constant 0 : index
    %c23 = arith.constant 23 : index
    %c0_92 = arith.constant 0 : index
    %c0_93 = arith.constant 0 : index
    %113 = vector.load %arg2[%c0_91, %c23, %c0_92, %c0_93] : memref<1x30x2x128xf32, #tpu.memory_space<vmem>>, vector<1x1x2x128xf32>
    %114 = vector.shape_cast %113 : vector<1x1x2x128xf32> to vector<2x128xf32>
    %cst_94 = arith.constant 1.140000e-01 : f32
    %115 = vector.broadcast %cst_94 : f32 to vector<2x128xf32>
    %116 = arith.mulf %115, %114 : vector<2x128xf32>
    %117 = arith.addf %112, %116 : vector<2x128xf32>
    %118 = arith.addf %103, %117 : vector<2x128xf32>
    %c0_95 = arith.constant 0 : index
    %c24 = arith.constant 24 : index
    %c0_96 = arith.constant 0 : index
    %c0_97 = arith.constant 0 : index
    %119 = vector.load %arg2[%c0_95, %c24, %c0_96, %c0_97] : memref<1x30x2x128xf32, #tpu.memory_space<vmem>>, vector<1x1x2x128xf32>
    %120 = vector.shape_cast %119 : vector<1x1x2x128xf32> to vector<2x128xf32>
    %cst_98 = arith.constant 2.989000e-01 : f32
    %121 = vector.broadcast %cst_98 : f32 to vector<2x128xf32>
    %122 = arith.mulf %121, %120 : vector<2x128xf32>
    %c0_99 = arith.constant 0 : index
    %c25 = arith.constant 25 : index
    %c0_100 = arith.constant 0 : index
    %c0_101 = arith.constant 0 : index
    %123 = vector.load %arg2[%c0_99, %c25, %c0_100, %c0_101] : memref<1x30x2x128xf32, #tpu.memory_space<vmem>>, vector<1x1x2x128xf32>
    %124 = vector.shape_cast %123 : vector<1x1x2x128xf32> to vector<2x128xf32>
    %cst_102 = arith.constant 5.870000e-01 : f32
    %125 = vector.broadcast %cst_102 : f32 to vector<2x128xf32>
    %126 = arith.mulf %125, %124 : vector<2x128xf32>
    %127 = arith.addf %122, %126 : vector<2x128xf32>
    %c0_103 = arith.constant 0 : index
    %c26 = arith.constant 26 : index
    %c0_104 = arith.constant 0 : index
    %c0_105 = arith.constant 0 : index
    %128 = vector.load %arg2[%c0_103, %c26, %c0_104, %c0_105] : memref<1x30x2x128xf32, #tpu.memory_space<vmem>>, vector<1x1x2x128xf32>
    %129 = vector.shape_cast %128 : vector<1x1x2x128xf32> to vector<2x128xf32>
    %cst_106 = arith.constant 1.140000e-01 : f32
    %130 = vector.broadcast %cst_106 : f32 to vector<2x128xf32>
    %131 = arith.mulf %130, %129 : vector<2x128xf32>
    %132 = arith.addf %127, %131 : vector<2x128xf32>
    %133 = arith.addf %118, %132 : vector<2x128xf32>
    %c0_107 = arith.constant 0 : index
    %c27 = arith.constant 27 : index
    %c0_108 = arith.constant 0 : index
    %c0_109 = arith.constant 0 : index
    %134 = vector.load %arg2[%c0_107, %c27, %c0_108, %c0_109] : memref<1x30x2x128xf32, #tpu.memory_space<vmem>>, vector<1x1x2x128xf32>
    %135 = vector.shape_cast %134 : vector<1x1x2x128xf32> to vector<2x128xf32>
    %cst_110 = arith.constant 2.989000e-01 : f32
    %136 = vector.broadcast %cst_110 : f32 to vector<2x128xf32>
    %137 = arith.mulf %136, %135 : vector<2x128xf32>
    %c0_111 = arith.constant 0 : index
    %c28 = arith.constant 28 : index
    %c0_112 = arith.constant 0 : index
    %c0_113 = arith.constant 0 : index
    %138 = vector.load %arg2[%c0_111, %c28, %c0_112, %c0_113] : memref<1x30x2x128xf32, #tpu.memory_space<vmem>>, vector<1x1x2x128xf32>
    %139 = vector.shape_cast %138 : vector<1x1x2x128xf32> to vector<2x128xf32>
    %cst_114 = arith.constant 5.870000e-01 : f32
    %140 = vector.broadcast %cst_114 : f32 to vector<2x128xf32>
    %141 = arith.mulf %140, %139 : vector<2x128xf32>
    %142 = arith.addf %137, %141 : vector<2x128xf32>
    %c0_115 = arith.constant 0 : index
    %c29 = arith.constant 29 : index
    %c0_116 = arith.constant 0 : index
    %c0_117 = arith.constant 0 : index
    %143 = vector.load %arg2[%c0_115, %c29, %c0_116, %c0_117] : memref<1x30x2x128xf32, #tpu.memory_space<vmem>>, vector<1x1x2x128xf32>
    %144 = vector.shape_cast %143 : vector<1x1x2x128xf32> to vector<2x128xf32>
    %cst_118 = arith.constant 1.140000e-01 : f32
    %145 = vector.broadcast %cst_118 : f32 to vector<2x128xf32>
    %146 = arith.mulf %145, %144 : vector<2x128xf32>
    %147 = arith.addf %142, %146 : vector<2x128xf32>
    %148 = arith.addf %133, %147 : vector<2x128xf32>
    %cst_119 = arith.constant 1.000000e-01 : f32
    %149 = vector.broadcast %cst_119 : f32 to vector<2x128xf32>
    %150 = arith.mulf %148, %149 : vector<2x128xf32>
    %151 = arith.subf %13, %150 : vector<2x128xf32>
    %cst_120 = arith.constant 0.000000e+00 : f32
    %152 = vector.broadcast %cst_120 : f32 to vector<2x128xf32>
    %153 = arith.maximumf %151, %152 : vector<2x128xf32>
    %cst_121 = arith.constant 0.00392156886 : f32
    %154 = vector.broadcast %cst_121 : f32 to vector<2x128xf32>
    %155 = arith.mulf %153, %154 : vector<2x128xf32>
    %c0_122 = arith.constant 0 : index
    %c0_123 = arith.constant 0 : index
    %c0_124 = arith.constant 0 : index
    %c0_125 = arith.constant 0 : index
    %156 = vector.load %arg3[%c0_122, %c0_123, %c0_124, %c0_125] : memref<1x10x2x128xf32, #tpu.memory_space<vmem>>, vector<1x1x2x128xf32>
    %157 = vector.shape_cast %156 : vector<1x1x2x128xf32> to vector<2x128xf32>
    %158 = vector.shape_cast %155 : vector<2x128xf32> to vector<1x1x2x128xf32>
    tpu.vector_store %arg3[%c0_122, %c0_123, %c0_124, %c0_125], %158 {strides = array<i32>} : memref<1x10x2x128xf32, #tpu.memory_space<vmem>>, vector<1x1x2x128xf32>,
    %159 = arith.subf %27, %150 : vector<2x128xf32>
    %cst_126 = arith.constant 0.000000e+00 : f32
    %160 = vector.broadcast %cst_126 : f32 to vector<2x128xf32>
    %161 = arith.maximumf %159, %160 : vector<2x128xf32>
    %cst_127 = arith.constant 0.00392156886 : f32
    %162 = vector.broadcast %cst_127 : f32 to vector<2x128xf32>
    %163 = arith.mulf %161, %162 : vector<2x128xf32>
    %c0_128 = arith.constant 0 : index
    %c1_129 = arith.constant 1 : index
    %c0_130 = arith.constant 0 : index
    %c0_131 = arith.constant 0 : index
    %164 = vector.load %arg3[%c0_128, %c1_129, %c0_130, %c0_131] : memref<1x10x2x128xf32, #tpu.memory_space<vmem>>, vector<1x1x2x128xf32>
    %165 = vector.shape_cast %164 : vector<1x1x2x128xf32> to vector<2x128xf32>
    %166 = vector.shape_cast %163 : vector<2x128xf32> to vector<1x1x2x128xf32>
    tpu.vector_store %arg3[%c0_128, %c1_129, %c0_130, %c0_131], %166 {strides = array<i32>} : memref<1x10x2x128xf32, #tpu.memory_space<vmem>>, vector<1x1x2x128xf32>,
    %167 = arith.subf %42, %150 : vector<2x128xf32>
    %cst_132 = arith.constant 0.000000e+00 : f32
    %168 = vector.broadcast %cst_132 : f32 to vector<2x128xf32>
    %169 = arith.maximumf %167, %168 : vector<2x128xf32>
    %cst_133 = arith.constant 0.00392156886 : f32
    %170 = vector.broadcast %cst_133 : f32 to vector<2x128xf32>
    %171 = arith.mulf %169, %170 : vector<2x128xf32>
    %c0_134 = arith.constant 0 : index
    %c2_135 = arith.constant 2 : index
    %c0_136 = arith.constant 0 : index
    %c0_137 = arith.constant 0 : index
    %172 = vector.load %arg3[%c0_134, %c2_135, %c0_136, %c0_137] : memref<1x10x2x128xf32, #tpu.memory_space<vmem>>, vector<1x1x2x128xf32>
    %173 = vector.shape_cast %172 : vector<1x1x2x128xf32> to vector<2x128xf32>
    %174 = vector.shape_cast %171 : vector<2x128xf32> to vector<1x1x2x128xf32>
    tpu.vector_store %arg3[%c0_134, %c2_135, %c0_136, %c0_137], %174 {strides = array<i32>} : memref<1x10x2x128xf32, #tpu.memory_space<vmem>>, vector<1x1x2x128xf32>,
    %175 = arith.subf %57, %150 : vector<2x128xf32>
    %cst_138 = arith.constant 0.000000e+00 : f32
    %176 = vector.broadcast %cst_138 : f32 to vector<2x128xf32>
    %177 = arith.maximumf %175, %176 : vector<2x128xf32>
    %cst_139 = arith.constant 0.00392156886 : f32
    %178 = vector.broadcast %cst_139 : f32 to vector<2x128xf32>
    %179 = arith.mulf %177, %178 : vector<2x128xf32>
    %c0_140 = arith.constant 0 : index
    %c3_141 = arith.constant 3 : index
    %c0_142 = arith.constant 0 : index
    %c0_143 = arith.constant 0 : index
    %180 = vector.load %arg3[%c0_140, %c3_141, %c0_142, %c0_143] : memref<1x10x2x128xf32, #tpu.memory_space<vmem>>, vector<1x1x2x128xf32>
    %181 = vector.shape_cast %180 : vector<1x1x2x128xf32> to vector<2x128xf32>
    %182 = vector.shape_cast %179 : vector<2x128xf32> to vector<1x1x2x128xf32>
    tpu.vector_store %arg3[%c0_140, %c3_141, %c0_142, %c0_143], %182 {strides = array<i32>} : memref<1x10x2x128xf32, #tpu.memory_space<vmem>>, vector<1x1x2x128xf32>,
    %183 = arith.subf %72, %150 : vector<2x128xf32>
    %cst_144 = arith.constant 0.000000e+00 : f32
    %184 = vector.broadcast %cst_144 : f32 to vector<2x128xf32>
    %185 = arith.maximumf %183, %184 : vector<2x128xf32>
    %cst_145 = arith.constant 0.00392156886 : f32
    %186 = vector.broadcast %cst_145 : f32 to vector<2x128xf32>
    %187 = arith.mulf %185, %186 : vector<2x128xf32>
    %c0_146 = arith.constant 0 : index
    %c4_147 = arith.constant 4 : index
    %c0_148 = arith.constant 0 : index
    %c0_149 = arith.constant 0 : index
    %188 = vector.load %arg3[%c0_146, %c4_147, %c0_148, %c0_149] : memref<1x10x2x128xf32, #tpu.memory_space<vmem>>, vector<1x1x2x128xf32>
    %189 = vector.shape_cast %188 : vector<1x1x2x128xf32> to vector<2x128xf32>
    %190 = vector.shape_cast %187 : vector<2x128xf32> to vector<1x1x2x128xf32>
    tpu.vector_store %arg3[%c0_146, %c4_147, %c0_148, %c0_149], %190 {strides = array<i32>} : memref<1x10x2x128xf32, #tpu.memory_space<vmem>>, vector<1x1x2x128xf32>,
    %191 = arith.subf %87, %150 : vector<2x128xf32>
    %cst_150 = arith.constant 0.000000e+00 : f32
    %192 = vector.broadcast %cst_150 : f32 to vector<2x128xf32>
    %193 = arith.maximumf %191, %192 : vector<2x128xf32>
    %cst_151 = arith.constant 0.00392156886 : f32
    %194 = vector.broadcast %cst_151 : f32 to vector<2x128xf32>
    %195 = arith.mulf %193, %194 : vector<2x128xf32>
    %c0_152 = arith.constant 0 : index
    %c5_153 = arith.constant 5 : index
    %c0_154 = arith.constant 0 : index
    %c0_155 = arith.constant 0 : index
    %196 = vector.load %arg3[%c0_152, %c5_153, %c0_154, %c0_155] : memref<1x10x2x128xf32, #tpu.memory_space<vmem>>, vector<1x1x2x128xf32>
    %197 = vector.shape_cast %196 : vector<1x1x2x128xf32> to vector<2x128xf32>
    %198 = vector.shape_cast %195 : vector<2x128xf32> to vector<1x1x2x128xf32>
    tpu.vector_store %arg3[%c0_152, %c5_153, %c0_154, %c0_155], %198 {strides = array<i32>} : memref<1x10x2x128xf32, #tpu.memory_space<vmem>>, vector<1x1x2x128xf32>,
    %199 = arith.subf %102, %150 : vector<2x128xf32>
    %cst_156 = arith.constant 0.000000e+00 : f32
    %200 = vector.broadcast %cst_156 : f32 to vector<2x128xf32>
    %201 = arith.maximumf %199, %200 : vector<2x128xf32>
    %cst_157 = arith.constant 0.00392156886 : f32
    %202 = vector.broadcast %cst_157 : f32 to vector<2x128xf32>
    %203 = arith.mulf %201, %202 : vector<2x128xf32>
    %c0_158 = arith.constant 0 : index
    %c6_159 = arith.constant 6 : index
    %c0_160 = arith.constant 0 : index
    %c0_161 = arith.constant 0 : index
    %204 = vector.load %arg3[%c0_158, %c6_159, %c0_160, %c0_161] : memref<1x10x2x128xf32, #tpu.memory_space<vmem>>, vector<1x1x2x128xf32>
    %205 = vector.shape_cast %204 : vector<1x1x2x128xf32> to vector<2x128xf32>
    %206 = vector.shape_cast %203 : vector<2x128xf32> to vector<1x1x2x128xf32>
    tpu.vector_store %arg3[%c0_158, %c6_159, %c0_160, %c0_161], %206 {strides = array<i32>} : memref<1x10x2x128xf32, #tpu.memory_space<vmem>>, vector<1x1x2x128xf32>,
    %207 = arith.subf %117, %150 : vector<2x128xf32>
    %cst_162 = arith.constant 0.000000e+00 : f32
    %208 = vector.broadcast %cst_162 : f32 to vector<2x128xf32>
    %209 = arith.maximumf %207, %208 : vector<2x128xf32>
    %cst_163 = arith.constant 0.00392156886 : f32
    %210 = vector.broadcast %cst_163 : f32 to vector<2x128xf32>
    %211 = arith.mulf %209, %210 : vector<2x128xf32>
    %c0_164 = arith.constant 0 : index
    %c7_165 = arith.constant 7 : index
    %c0_166 = arith.constant 0 : index
    %c0_167 = arith.constant 0 : index
    %212 = vector.load %arg3[%c0_164, %c7_165, %c0_166, %c0_167] : memref<1x10x2x128xf32, #tpu.memory_space<vmem>>, vector<1x1x2x128xf32>
    %213 = vector.shape_cast %212 : vector<1x1x2x128xf32> to vector<2x128xf32>
    %214 = vector.shape_cast %211 : vector<2x128xf32> to vector<1x1x2x128xf32>
    tpu.vector_store %arg3[%c0_164, %c7_165, %c0_166, %c0_167], %214 {strides = array<i32>} : memref<1x10x2x128xf32, #tpu.memory_space<vmem>>, vector<1x1x2x128xf32>,
    %215 = arith.subf %132, %150 : vector<2x128xf32>
    %cst_168 = arith.constant 0.000000e+00 : f32
    %216 = vector.broadcast %cst_168 : f32 to vector<2x128xf32>
    %217 = arith.maximumf %215, %216 : vector<2x128xf32>
    %cst_169 = arith.constant 0.00392156886 : f32
    %218 = vector.broadcast %cst_169 : f32 to vector<2x128xf32>
    %219 = arith.mulf %217, %218 : vector<2x128xf32>
    %c0_170 = arith.constant 0 : index
    %c8_171 = arith.constant 8 : index
    %c0_172 = arith.constant 0 : index
    %c0_173 = arith.constant 0 : index
    %220 = vector.load %arg3[%c0_170, %c8_171, %c0_172, %c0_173] : memref<1x10x2x128xf32, #tpu.memory_space<vmem>>, vector<1x1x2x128xf32>
    %221 = vector.shape_cast %220 : vector<1x1x2x128xf32> to vector<2x128xf32>
    %222 = vector.shape_cast %219 : vector<2x128xf32> to vector<1x1x2x128xf32>
    tpu.vector_store %arg3[%c0_170, %c8_171, %c0_172, %c0_173], %222 {strides = array<i32>} : memref<1x10x2x128xf32, #tpu.memory_space<vmem>>, vector<1x1x2x128xf32>,
    %223 = arith.subf %147, %150 : vector<2x128xf32>
    %cst_174 = arith.constant 0.000000e+00 : f32
    %224 = vector.broadcast %cst_174 : f32 to vector<2x128xf32>
    %225 = arith.maximumf %223, %224 : vector<2x128xf32>
    %cst_175 = arith.constant 0.00392156886 : f32
    %226 = vector.broadcast %cst_175 : f32 to vector<2x128xf32>
    %227 = arith.mulf %225, %226 : vector<2x128xf32>
    %c0_176 = arith.constant 0 : index
    %c9_177 = arith.constant 9 : index
    %c0_178 = arith.constant 0 : index
    %c0_179 = arith.constant 0 : index
    %228 = vector.load %arg3[%c0_176, %c9_177, %c0_178, %c0_179] : memref<1x10x2x128xf32, #tpu.memory_space<vmem>>, vector<1x1x2x128xf32>
    %229 = vector.shape_cast %228 : vector<1x1x2x128xf32> to vector<2x128xf32>
    %230 = vector.shape_cast %227 : vector<2x128xf32> to vector<1x1x2x128xf32>
    tpu.vector_store %arg3[%c0_176, %c9_177, %c0_178, %c0_179], %230 {strides = array<i32>} : memref<1x10x2x128xf32, #tpu.memory_space<vmem>>, vector<1x1x2x128xf32>,
    return
  }
  func.func @transform_0(%arg0: i32, %arg1: i32) -> (i32, i32, i32, i32) {
    %c0_i32 = arith.constant 0 : i32
    %c0_i32_0 = arith.constant 0 : i32
    %c0_i32_1 = arith.constant 0 : i32
    return %arg0, %c0_i32, %arg1, %c0_i32_0 : i32, i32, i32, i32
  }
  func.func @transform_1(%arg0: i32, %arg1: i32) -> (i32, i32, i32, i32) {
    %c0_i32 = arith.constant 0 : i32
    %c0_i32_0 = arith.constant 0 : i32
    %c0_i32_1 = arith.constant 0 : i32
    return %arg0, %c0_i32, %arg1, %c0_i32_0 : i32, i32, i32, i32
  }
}

</mosaic_0001>

<llo_original>
// kernel: tpu_custom_call.1
$region0: #{tpu_custom_call.1}
  #allocation0 [shape = 'u32[]', space=smem, size = 0x4, offset = 0x4, fixed_abs, tag = 'smem constant byte address 0x4 - core index']
  #allocation1 [shape = 'u32[144,128]{1,0:T(1,128)}', space=vmem, size = 0x12000, scoped, tag = 'internal scratch']
  %s0 = inlined_call_operand.hbm [shape: f32[2,30,2,128], index: 0, kind: input, shape index: {}]
  %s1 = inlined_call_operand.hbm [shape: f32[2,10,2,128], index: 1, kind: output, shape index: {}]
  %s2 = sld [smem:[#allocation0]]
  $region41: #{tpu_custom_call.1} parent=0
    _
  %s4 = ssub.s32 1, %s2
  %s5 = scalar_select 0, %s4, %s2
  $region1: #{tpu_custom_call.1} parent=0
    #allocation2 [shape = 'u8[61440]{0}', space=vmem, size = 0xf000, scoped, tag = 'input window, operand 0']
    #allocation3 [shape = 's32[2]{0}', space=sflag, size = 0x8, scoped, tag = 'scoped memory for tpu_custom_call.1']
    #allocation4 [shape = 's32[2]{0}', space=sflag, size = 0x8, scoped, tag = 'scoped memory for tpu_custom_call.1']
    #allocation5 [shape = 'u8[20480]{0}', space=vmem, size = 0x5000, scoped, tag = 'output window, operand 0']
    %6 = vsyncpa [#allocation3], 0
    %s7 = scalar_lea.sflag [#allocation3], 1
    %8 = vsyncpa %s7, 0
    %9 = vsyncpa [#allocation4], 0
    %s10 = scalar_lea.sflag [#allocation4], 1
    %11 = vsyncpa %s10, 0
    loop: start=0, step=1, limit=4
    $region2: #{tpu_custom_call.1} parent=1 // loop_pre_header
      _
    $region3: #{tpu_custom_call.1} parent=1 // loop_header
      %s13 = sphi 0, %s17
      %p14 = scmp.ge.s32.totalorder %s13, 4
      %s20 = sphi 0, %s32
      %s21 = sphi 0, %s28
      %s22 = sphi 0, %s20
      %s23 = sphi 0, %s21
      %s24 = sphi 0, %s22
      %s25 = sphi 0, %s23
      %s37 = sphi 0, %s39
      %s40 = sphi 0, %s37
      %s41 = sphi 0, %s40
      %s57 = sphi 0, %s41
      %s65 = sphi 0, %s67
      %s68 = sphi 0, %s65
      %s69 = sphi 0, %s68
      %s85 = sphi 0, %s69
    $region4: #{tpu_custom_call.1} parent=1 // loop_header_branch
      %16 = sbr.rel (%p14) target = $region8
    $region5: #{tpu_custom_call.1} parent=1 // loop_body
      %s18 = ssub.s32 %s13, 1
      %s19 = ssub.s32 %s13, 2
      %s26 = sadd.s32 1, %s21
      %p27 = scmp.ge.s32.totalorder %s26, 1
      %s28 = scalar_select %p27, 0, %s26
      %s29 = sadd.s32 1, %s20
      %s30 = scalar_select %p27, %s29, %s20
      %p31 = scmp.ge.s32.totalorder %s30, 2
      %s32 = scalar_select %p31, 0, %s30
      %s33 = ssub.s32 %s20, %s32
      %s34 = ssub.s32 %s21, %s28
      %s35 = sor.u32 %s33, %s34
      %p36 = scmp.eq.s32.totalorder %s35, 0
      %s38 = sadd.s32 %s37, 1
      %s39 = scalar_select %p36, %s37, %s38
      %p42 = pneg %p36
      %p43 = scmp.eq.s32.totalorder %s13, 1
      %p44 = por %p42, %p43
      %p45 = scmp.ne.s32.totalorder %s37, %s40
      %p46 = scmp.eq.s32.totalorder %s13, 0
      %p47 = por %p45, %p46
      %p48 = scmp.ne.s32.totalorder %s37, %s40
      %p49 = scmp.eq.s32.totalorder %s18, 1
      %p50 = por %p48, %p49
      %p51 = scmp.ne.s32.totalorder %s40, %s41
      %p52 = scmp.eq.s32.totalorder %s18, 0
      %p53 = por %p51, %p52
      %p54 = scmp.ne.s32.totalorder %s40, %s41
      %p55 = scmp.eq.s32.totalorder %s19, 1
      %p56 = por %p54, %p55
      %p58 = scmp.ne.s32.totalorder %s41, %s57
      %p59 = scmp.eq.s32.totalorder %s19, 0
      %p60 = por %p58, %p59
      %s61 = ssub.s32 %s20, %s32
      %s62 = ssub.s32 %s21, %s28
      %s63 = sor.u32 %s61, %s62
      %p64 = scmp.eq.s32.totalorder %s63, 0
      %s66 = sadd.s32 %s65, 1
      %s67 = scalar_select %p64, %s65, %s66
      %p70 = pneg %p64
      %p71 = scmp.eq.s32.totalorder %s13, 1
      %p72 = por %p70, %p71
      %p73 = scmp.ne.s32.totalorder %s65, %s68
      %p74 = scmp.eq.s32.totalorder %s13, 0
      %p75 = por %p73, %p74
      %p76 = scmp.ne.s32.totalorder %s65, %s68
      %p77 = scmp.eq.s32.totalorder %s18, 1
      %p78 = por %p76, %p77
      %p79 = scmp.ne.s32.totalorder %s68, %s69
      %p80 = scmp.eq.s32.totalorder %s18, 0
      %p81 = por %p79, %p80
      %p82 = scmp.ne.s32.totalorder %s68, %s69
      %p83 = scmp.eq.s32.totalorder %s19, 1
      %p84 = por %p82, %p83
      %p86 = scmp.ne.s32.totalorder %s69, %s85
      %p87 = scmp.eq.s32.totalorder %s19, 0
      %p88 = por %p86, %p87
      %p89 = scmp.le.s32.totalorder 1, %s13
      %p90 = scmp.lt.s32.totalorder %s13, 3
      %p91 = pnand %p89, %p90
      %p92 = pneg %p91
      // Predicated region
      $region9: #{tpu_custom_call.1} parent=5 // pred_check
        _
      $region10: #{tpu_custom_call.1} parent=5 // pred_check_branch
        %94 = sbr.rel (%p91) target = $region12
      $region11: #{tpu_custom_call.1} parent=5 // pred_region
        %s95 = ssub.s32 %s13, 1
      $region12: #{tpu_custom_call.1} parent=5 // pred_fallthru
        _
      %p96 = scmp.lt.s32.totalorder %s13, 2
      // Predicated region
      $region13: #{tpu_custom_call.1} parent=5 // pred_check
        %p97 = pneg %p96
      $region14: #{tpu_custom_call.1} parent=5 // pred_check_branch
        %99 = sbr.rel (%p97) target = $region16
      $region15: #{tpu_custom_call.1} parent=5 // pred_region
        // Predicated region
        $region17: #{tpu_custom_call.1} parent=15 // pred_check
          %p100 = pneg %p47
        $region18: #{tpu_custom_call.1} parent=15 // pred_check_branch
          %102 = sbr.rel (%p100) target = $region20
        $region19: #{tpu_custom_call.1} parent=15 // pred_region
          %s103 = sand.u32 %s37, 1
          %s104 = scalar_lea.sflag [#allocation3], %s103
          %s105 = sand.u32 %s37, 1
          %s106 = smul.addr %s105, 60
          %s107 = scalar_lea.vmem [#allocation2], %s106
          %s109 = ssub.s32 960, 960
          %110 = vsyncadd %s104, %s109
          %s111 = smul.addr %s20, 30
          %s112 = sadd.s32 %s21, %s111
          %s113 = smul.addr %s112, 32
          %s114 = scalar_lea.hbm %s0, %s113
          %s115 = sshll.u32 %s107, 4
          %s116 = int_to_ptr.vmem [resolvable:$true] %s115
          %121 = dma.hbm_to_vmem [thread:$0]  %s114, 960, %s116, %s104, 32, 32, 2
        $region20: #{tpu_custom_call.1} parent=15 // pred_fallthru
          _
      $region16: #{tpu_custom_call.1} parent=5 // pred_fallthru
        _
      %p122 = scmp.le.s32.totalorder 1, %s13
      %p123 = scmp.lt.s32.totalorder %s13, 3
      %p124 = pnand %p122, %p123
      %p125 = pneg %p124
      // Predicated region
      $region21: #{tpu_custom_call.1} parent=5 // pred_check
        _
      $region22: #{tpu_custom_call.1} parent=5 // pred_check_branch
        %127 = sbr.rel (%p124) target = $region24
      $region23: #{tpu_custom_call.1} parent=5 // pred_region
        %s128 = ssub.s32 %s13, 1
        %s129 = sand.u32 %s40, 1
        %s130 = scalar_lea.sflag [#allocation3], %s129
        %s131 = sand.u32 %s40, 1
        %s132 = smul.addr %s131, 60
        %s133 = scalar_lea.vmem [#allocation2], %s132
        // Predicated region
        $region25: #{tpu_custom_call.1} parent=23 // pred_check
          %p134 = pneg %p53
        $region26: #{tpu_custom_call.1} parent=23 // pred_check_branch
          %136 = sbr.rel (%p134) target = $region28
        $region27: #{tpu_custom_call.1} parent=23 // pred_region
          %137 = dma.done %s130, 960
        $region28: #{tpu_custom_call.1} parent=23 // pred_fallthru
          _
        %s138 = sand.u32 %s40, 1
        %s139 = scalar_lea.sflag [#allocation3], %s138
        %s140 = sand.u32 %s40, 1
        %s141 = smul.addr %s140, 60
        %s142 = scalar_lea.vmem [#allocation2], %s141
        %p143 = pneg %p53
        %p144 = pneg %p50
        %p145 = pneg %p81
        %p146 = pneg %p78
        %s147 = sand.u32 %s68, 1
        %s148 = scalar_lea.sflag [#allocation4], %s147
        %s149 = sand.u32 %s68, 1
        %s150 = smul.addr %s149, 20
        %s151 = scalar_lea.vmem [#allocation5], %s150
        %v152 = vld [vmem:[%s133] sm:$0x3]
        %v153 = vmul.f32 %v152, 0.2989
        %s154 = scalar_lea.vmem %s133, 2 [#allocation2]
        %v155 = vld [vmem:[%s154] sm:$0x3]
        %v156 = vmul.f32 %v155, 0.587
        %v157 = vadd.f32 %v153, %v156
        %s158 = scalar_lea.vmem %s133, 4 [#allocation2]
        %v159 = vld [vmem:[%s158] sm:$0x3]
        %v160 = vmul.f32 %v159, 0.114
        %v161 = vadd.f32 %v157, %v160
        %s162 = scalar_lea.vmem %s133, 6 [#allocation2]
        %v163 = vld [vmem:[%s162] sm:$0x3]
        %v164 = vmul.f32 %v163, 0.2989
        %s165 = scalar_lea.vmem %s133, 8 [#allocation2]
        %v166 = vld [vmem:[%s165] sm:$0x3]
        %v167 = vmul.f32 %v166, 0.587
        %v168 = vadd.f32 %v164, %v167
        %s169 = scalar_lea.vmem %s133, 10 [#allocation2]
        %v170 = vld [vmem:[%s169] sm:$0x3]
        %v171 = vmul.f32 %v170, 0.114
        %v172 = vadd.f32 %v168, %v171
        %v173 = vadd.f32 %v161, %v172
        %s174 = scalar_lea.vmem %s133, 12 [#allocation2]
        %v175 = vld [vmem:[%s174] sm:$0x3]
        %v176 = vmul.f32 %v175, 0.2989
        %s177 = scalar_lea.vmem %s133, 14 [#allocation2]
        %v178 = vld [vmem:[%s177] sm:$0x3]
        %v179 = vmul.f32 %v178, 0.587
        %v180 = vadd.f32 %v176, %v179
        %s181 = scalar_lea.vmem %s133, 16 [#allocation2]
        %v182 = vld [vmem:[%s181] sm:$0x3]
        %v183 = vmul.f32 %v182, 0.114
        %v184 = vadd.f32 %v180, %v183
        %v185 = vadd.f32 %v173, %v184
        %s186 = scalar_lea.vmem %s133, 18 [#allocation2]
        %v187 = vld [vmem:[%s186] sm:$0x3]
        %v188 = vmul.f32 %v187, 0.2989
        %s189 = scalar_lea.vmem %s133, 20 [#allocation2]
        %v190 = vld [vmem:[%s189] sm:$0x3]
        %v191 = vmul.f32 %v190, 0.587
        %v192 = vadd.f32 %v188, %v191
        %s193 = scalar_lea.vmem %s133, 22 [#allocation2]
        %v194 = vld [vmem:[%s193] sm:$0x3]
        %v195 = vmul.f32 %v194, 0.114
        %v196 = vadd.f32 %v192, %v195
        %v197 = vadd.f32 %v185, %v196
        %s198 = scalar_lea.vmem %s133, 24 [#allocation2]
        %v199 = vld [vmem:[%s198] sm:$0x3]
        %v200 = vmul.f32 %v199, 0.2989
        %s201 = scalar_lea.vmem %s133, 26 [#allocation2]
        %v202 = vld [vmem:[%s201] sm:$0x3]
        %v203 = vmul.f32 %v202, 0.587
        %v204 = vadd.f32 %v200, %v203
        %s205 = scalar_lea.vmem %s133, 28 [#allocation2]
        %v206 = vld [vmem:[%s205] sm:$0x3]
        %v207 = vmul.f32 %v206, 0.114
        %v208 = vadd.f32 %v204, %v207
        %v209 = vadd.f32 %v197, %v208
        %s210 = scalar_lea.vmem %s133, 30 [#allocation2]
        %v211 = vld [vmem:[%s210] sm:$0x3]
        %v212 = vmul.f32 %v211, 0.2989
        %s213 = scalar_lea.vmem %s133, 32 [#allocation2]
        %v214 = vld [vmem:[%s213] sm:$0x3]
        %v215 = vmul.f32 %v214, 0.587
        %v216 = vadd.f32 %v212, %v215
        %s217 = scalar_lea.vmem %s133, 34 [#allocation2]
        %v218 = vld [vmem:[%s217] sm:$0x3]
        %v219 = vmul.f32 %v218, 0.114
        %v220 = vadd.f32 %v216, %v219
        %v221 = vadd.f32 %v209, %v220
        %s222 = scalar_lea.vmem %s133, 36 [#allocation2]
        %v223 = vld [vmem:[%s222] sm:$0x3]
        %v224 = vmul.f32 %v223, 0.2989
        %s225 = scalar_lea.vmem %s133, 38 [#allocation2]
        %v226 = vld [vmem:[%s225] sm:$0x3]
        %v227 = vmul.f32 %v226, 0.587
        %v228 = vadd.f32 %v224, %v227
        %s229 = scalar_lea.vmem %s133, 40 [#allocation2]
        %v230 = vld [vmem:[%s229] sm:$0x3]
        %v231 = vmul.f32 %v230, 0.114
        %v232 = vadd.f32 %v228, %v231
        %v233 = vadd.f32 %v221, %v232
        %s234 = scalar_lea.vmem %s133, 42 [#allocation2]
        %v235 = vld [vmem:[%s234] sm:$0x3]
        %v236 = vmul.f32 %v235, 0.2989
        %s237 = scalar_lea.vmem %s133, 44 [#allocation2]
        %v238 = vld [vmem:[%s237] sm:$0x3]
        %v239 = vmul.f32 %v238, 0.587
        %v240 = vadd.f32 %v236, %v239
        %s241 = scalar_lea.vmem %s133, 46 [#allocation2]
        %v242 = vld [vmem:[%s241] sm:$0x3]
        %v243 = vmul.f32 %v242, 0.114
        %v244 = vadd.f32 %v240, %v243
        %v245 = vadd.f32 %v233, %v244
        %s246 = scalar_lea.vmem %s133, 48 [#allocation2]
        %v247 = vld [vmem:[%s246] sm:$0x3]
        %v248 = vmul.f32 %v247, 0.2989
        %s249 = scalar_lea.vmem %s133, 50 [#allocation2]
        %v250 = vld [vmem:[%s249] sm:$0x3]
        %v251 = vmul.f32 %v250, 0.587
        %v252 = vadd.f32 %v248, %v251
        %s253 = scalar_lea.vmem %s133, 52 [#allocation2]
        %v254 = vld [vmem:[%s253] sm:$0x3]
        %v255 = vmul.f32 %v254, 0.114
        %v256 = vadd.f32 %v252, %v255
        %v257 = vadd.f32 %v245, %v256
        %s258 = scalar_lea.vmem %s133, 54 [#allocation2]
        %v259 = vld [vmem:[%s258] sm:$0x3]
        %v260 = vmul.f32 %v259, 0.2989
        %s261 = scalar_lea.vmem %s133, 56 [#allocation2]
        %v262 = vld [vmem:[%s261] sm:$0x3]
        %v263 = vmul.f32 %v262, 0.587
        %v264 = vadd.f32 %v260, %v263
        %s265 = scalar_lea.vmem %s133, 58 [#allocation2]
        %v266 = vld [vmem:[%s265] sm:$0x3]
        %v267 = vmul.f32 %v266, 0.114
        %v268 = vadd.f32 %v264, %v267
        %v269 = vadd.f32 %v257, %v268
        %v270 = vmul.f32 %v269, 0.1
        %v271 = vsub.f32 %v161, %v270
        %v272 = vmax.f32 %v271, 0.0
        %v273 = vmul.f32 %v272, 0.003921569
        %274 = vst [vmem:[%s151] sm:$0x3] %v273
        %v275 = vsub.f32 %v172, %v270
        %v276 = vmax.f32 %v275, 0.0
        %v277 = vmul.f32 %v276, 0.003921569
        %s278 = scalar_lea.vmem %s151, 2 [#allocation5]
        %279 = vst [vmem:[%s278] sm:$0x3] %v277
        %v280 = vsub.f32 %v184, %v270
        %v281 = vmax.f32 %v280, 0.0
        %v282 = vmul.f32 %v281, 0.003921569
        %s283 = scalar_lea.vmem %s151, 4 [#allocation5]
        %284 = vst [vmem:[%s283] sm:$0x3] %v282
        %v285 = vsub.f32 %v196, %v270
        %v286 = vmax.f32 %v285, 0.0
        %v287 = vmul.f32 %v286, 0.003921569
        %s288 = scalar_lea.vmem %s151, 6 [#allocation5]
        %289 = vst [vmem:[%s288] sm:$0x3] %v287
        %v290 = vsub.f32 %v208, %v270
        %v291 = vmax.f32 %v290, 0.0
        %v292 = vmul.f32 %v291, 0.003921569
        %s293 = scalar_lea.vmem %s151, 8 [#allocation5]
        %294 = vst [vmem:[%s293] sm:$0x3] %v292
        %v295 = vsub.f32 %v220, %v270
        %v296 = vmax.f32 %v295, 0.0
        %v297 = vmul.f32 %v296, 0.003921569
        %s298 = scalar_lea.vmem %s151, 10 [#allocation5]
        %299 = vst [vmem:[%s298] sm:$0x3] %v297
        %v300 = vsub.f32 %v232, %v270
        %v301 = vmax.f32 %v300, 0.0
        %v302 = vmul.f32 %v301, 0.003921569
        %s303 = scalar_lea.vmem %s151, 12 [#allocation5]
        %304 = vst [vmem:[%s303] sm:$0x3] %v302
        %v305 = vsub.f32 %v244, %v270
        %v306 = vmax.f32 %v305, 0.0
        %v307 = vmul.f32 %v306, 0.003921569
        %s308 = scalar_lea.vmem %s151, 14 [#allocation5]
        %309 = vst [vmem:[%s308] sm:$0x3] %v307
        %v310 = vsub.f32 %v256, %v270
        %v311 = vmax.f32 %v310, 0.0
        %v312 = vmul.f32 %v311, 0.003921569
        %s313 = scalar_lea.vmem %s151, 16 [#allocation5]
        %314 = vst [vmem:[%s313] sm:$0x3] %v312
        %v315 = vsub.f32 %v268, %v270
        %v316 = vmax.f32 %v315, 0.0
        %v317 = vmul.f32 %v316, 0.003921569
        %s318 = scalar_lea.vmem %s151, 18 [#allocation5]
        %319 = vst [vmem:[%s318] sm:$0x3] %v317
        %s320 = sand.u32 %s68, 1
        %s321 = scalar_lea.sflag [#allocation4], %s320
        %s322 = sand.u32 %s68, 1
        %s323 = smul.addr %s322, 20
        %s324 = scalar_lea.vmem [#allocation5], %s323
        // Predicated region
        $region29: #{tpu_custom_call.1} parent=23 // pred_check
          %p325 = pneg %p78
        $region30: #{tpu_custom_call.1} parent=23 // pred_check_branch
          %327 = sbr.rel (%p325) target = $region32
        $region31: #{tpu_custom_call.1} parent=23 // pred_region
          %s329 = ssub.s32 320, 320
          %330 = vsyncadd %s321, %s329
          %s331 = smul.addr %s22, 10
          %s332 = sadd.s32 %s23, %s331
          %s333 = smul.addr %s332, 32
          %s334 = scalar_lea.hbm %s1, %s333
          %s335 = sshll.u32 %s324, 4
          %s336 = int_to_ptr.vmem [resolvable:$true] %s335
          %341 = dma.vmem_to_hbm [thread:$0]  %s336, 320, %s334, %s321, 32, 32, 2
        $region32: #{tpu_custom_call.1} parent=23 // pred_fallthru
          _
      $region24: #{tpu_custom_call.1} parent=5 // pred_fallthru
        _
      %p342 = scmp.le.s32.totalorder 2, %s13
      // Predicated region
      $region33: #{tpu_custom_call.1} parent=5 // pred_check
        %p343 = pneg %p342
      $region34: #{tpu_custom_call.1} parent=5 // pred_check_branch
        %345 = sbr.rel (%p343) target = $region36
      $region35: #{tpu_custom_call.1} parent=5 // pred_region
        %s346 = ssub.s32 %s13, 2
        // Predicated region
        $region37: #{tpu_custom_call.1} parent=35 // pred_check
          %p347 = pneg %p84
        $region38: #{tpu_custom_call.1} parent=35 // pred_check_branch
          %349 = sbr.rel (%p347) target = $region40
        $region39: #{tpu_custom_call.1} parent=35 // pred_region
          %s350 = sand.u32 %s69, 1
          %s351 = scalar_lea.sflag [#allocation4], %s350
          %s352 = sand.u32 %s69, 1
          %s353 = smul.addr %s352, 20
          %s354 = scalar_lea.vmem [#allocation5], %s353
          %355 = dma.done %s351, 320
        $region40: #{tpu_custom_call.1} parent=35 // pred_fallthru
          _
      $region36: #{tpu_custom_call.1} parent=5 // pred_fallthru
        _
    $region6: #{tpu_custom_call.1} parent=1 // loop_footer
      %s17 = sadd.s32 1, %s13
    $region7: #{tpu_custom_call.1} parent=1 // loop_footer_branch
      %12 = sbr.rel target = $region3
    $region8: #{tpu_custom_call.1} parent=1 // loop_exit
      _
    %356 = vsyncpa [#allocation3], 1
    %s357 = scalar_lea.sflag [#allocation3], 1
    %358 = vsyncpa %s357, 1
    %359 = vsyncpa [#allocation4], 1
    %s360 = scalar_lea.sflag [#allocation4], 1
    %361 = vsyncpa %s360, 1

</llo_original>
